<compile_context>
chip_gen: v6e
topology: v6e:2x2x1
jax: 0.10.0
libtpu: 0.0.40
codegen_flags: <defaults>
</compile_context>

<pallas_src>
import jax
import jax.numpy as jnp
from jax.experimental import pallas as pl
from jax.experimental.pallas import tpu as pltpu

INT16_MAX = 32767.0

# Below this element count the kernel-dispatch + per-step overhead dominates;
# a fused XLA op is strictly cheaper.
_SMALL_N = 256 * 1024


def _scaler_kernel(x_ref, o_ref):
    # Elementwise hot path on the VPU; cast to f32 in-kernel so the wrapper
    # never materializes a pre-pass HBM copy of the input.
    o_ref[...] = (
        x_ref[...].astype(jnp.float32) / jnp.float32(INT16_MAX)
    ).astype(o_ref.dtype)


def _tuning_for_device():
    """Per-generation (block_bytes_f32, vmem_limit_bytes | None)."""
    try:
        kind = jax.devices()[0].device_kind.lower()
    except Exception:  # pragma: no cover - defensive; fall back to safe tuning
        kind = ""
    if "v7" in kind:
        # v7x: ~3.2 TB/s HBM -> bigger blocks amortize the ~0.35us/step cost.
        # 8 MiB in + 8 MiB out, double-buffered = 32 MiB live, so raise the
        # scoped VMEM limit explicitly (64 MiB physical per TC).
        return 8 * 1024 * 1024, 48 * 1024 * 1024
    if "v6" in kind:
        # v6e: 4 MiB blocks -> 16 MiB live, fits the 32 MiB scoped default.
        return 4 * 1024 * 1024, None
    # v5e (and unknown generations): 2 MiB blocks -> 8 MiB live, safely under
    # the 16 MiB scoped-VMEM default; larger tiles gain nothing at 0.82 TB/s.
    return 2 * 1024 * 1024, None


def _pick_lanes(n: int) -> int:
    """Largest lane width (multiple of 128) that divides n (n % 128 == 0)."""
    for lanes in (1024, 512, 256, 128):
        if n % lanes == 0:
            return lanes
    raise ValueError("n must be a multiple of 128 for the kernel path")


def _pick_tm(rows: int, tm_target: int) -> int:
    """Row-tile: multiple of 8, >= ~4 grid steps, avoid tiny trailing block."""
    # Never collapse to a single block: keep >=4 steps for pipelining and so
    # the "parallel" axis can shard across both TensorCores on v7x.
    tm_cap = min(tm_target, max(8, (pl.cdiv(rows, 4) // 8) * 8))
    # Prefer a nearby tm that divides rows exactly (no nearly-empty last step),
    # but never shrink the tile by more than ~25%.
    lo = max(8, ((tm_cap * 3 // 4) // 8) * 8)
    for tm in range(tm_cap, lo - 1, -8):
        if rows % tm == 0:
            return tm
    return tm_cap


def _run_kernel_flat(x_flat: jax.Array, out_dtype) -> jax.Array:
    """Scale a flat, 128-aligned array with the tiled, pipelined kernel."""
    n = x_flat.shape[0]
    block_bytes, vmem_limit = _tuning_for_device()

    lanes = _pick_lanes(n)
    rows = n // lanes
    x2d = x_flat.reshape(rows, lanes)  # contiguous reshape: free

    tm_target = max(8, (block_bytes // (4 * lanes) // 8) * 8)
    tm = _pick_tm(rows, tm_target)
    grid = (pl.cdiv(rows, tm),)

    cp_kwargs = dict(dimension_semantics=("parallel",))
    if vmem_limit is not None:
        cp_kwargs["vmem_limit_bytes"] = vmem_limit

    out2d = pl.pallas_call(
        _scaler_kernel,
        out_shape=jax.ShapeDtypeStruct((rows, lanes), out_dtype),
        grid_spec=pl.GridSpec(
            grid=grid,
            in_specs=[pl.BlockSpec((tm, lanes), lambda i: (i, 0))],
            out_specs=pl.BlockSpec((tm, lanes), lambda i: (i, 0)),
        ),
        compiler_params=pltpu.CompilerParams(**cp_kwargs),
    )(x2d)
    return out2d.reshape(n)


def scaler(x: jax.Array, *, out_dtype=jnp.float32) -> jax.Array:
    """x / 32767.0, matching torch `Scaler.forward` (float32 output by default).

    Accepts any rank / dtype. Pass the narrow storage dtype (int16/bf16) and,
    if the consumer allows it, out_dtype=jnp.bfloat16 to halve HBM traffic.
    Note: integer magnitudes > 2^24 lose precision in the f32 cast, exactly as
    a PyTorch float32 path would.
    """
    orig_shape = x.shape
    n = x.size
    if n == 0:
        return jnp.zeros(orig_shape, out_dtype)

    # Tiny-input fast path: a fused XLA op beats kernel dispatch overhead.
    if n < _SMALL_N:
        return (x.astype(jnp.float32) / jnp.float32(INT16_MAX)).astype(out_dtype)

    x_flat = x.reshape(-1)

    if n % 128 == 0:
        # Common case: no pad, no slice, zero extra HBM passes.
        return _run_kernel_flat(x_flat, out_dtype).reshape(orig_shape)

    # Ragged case: kernel over the 128-aligned bulk, fused XLA multiply for the
    # <128-element tail (no full-array pad/slice passes).
    # TODO(synk): for huge ragged tensors, an in-kernel masked tail store would
    # also avoid the concatenate's output stitch copy.
    n_bulk = (n // 128) * 128
    bulk_out = _run_kernel_flat(x_flat[:n_bulk], out_dtype)
    tail_out = (
        x_flat[n_bulk:].astype(jnp.float32) / jnp.float32(INT16_MAX)
    ).astype(out_dtype)
    return jnp.concatenate([bulk_out, tail_out]).reshape(orig_shape)


if __name__ == "__main__":
    key = jax.random.PRNGKey(0)
    k1, k2, k3 = jax.random.split(key, 3)

    # 1) Module-spec sized input (small -> fused XLA fast path).
    x_small = jax.random.uniform(
        k1, (2, 4, 16, 16), jnp.float32, minval=-32768.0, maxval=32767.0
    )
    # 2) Larger 128-aligned input -> Pallas kernel path (lane-dense 2-D slab).
    x_big = jax.random.uniform(
        k2, (8, 4, 128, 128), jnp.float32, minval=-32768.0, maxval=32767.0
    )
    # 3) Large ragged input (size % 128 != 0) -> kernel bulk + XLA tail.
    x_ragged = jax.random.uniform(
        k3, (5, 7, 97, 131), jnp.float32, minval=-32768.0, maxval=32767.0
    )

    for x in (x_small, x_big, x_ragged):
        out = scaler(x)
        jax.block_until_ready(out)
        expected = x / INT16_MAX
        assert out.shape == x.shape
        assert out.dtype == jnp.float32
        assert jnp.allclose(out, expected, atol=1e-6, rtol=1e-6)

    print("KERNEL_OK")
</pallas_src>

<mosaic_0001>
module attributes {stable_mosaic.version = 11 : i64} {
  func.func @_scaler_kernel(%arg0: i32, %arg1: memref<128x1024xf32, #tpu.memory_space<vmem>>, %arg2: memref<128x1024xf32, #tpu.memory_space<vmem>>) attributes {dimension_semantics = [#tpu.dimension_semantics<parallel>], iteration_bounds = array<i64: 4>, scalar_prefetch = 0 : i64, scratch_operands = 0 : i64, tpu.core_type = #tpu.core_type<tc>, window_params = [{transform_indices = @transform_0, window_bounds = array<i64: 128, 1024>}, {transform_indices = @transform_1, window_bounds = array<i64: 128, 1024>}]} {
    %c0 = arith.constant 0 : index
    %c0_0 = arith.constant 0 : index
    %0 = vector.load %arg1[%c0, %c0_0] : memref<128x1024xf32, #tpu.memory_space<vmem>>, vector<128x1024xf32>
    %cst = arith.constant 3.276700e+04 : f32
    %1 = vector.broadcast %cst : f32 to vector<128x1024xf32>
    %2 = arith.divf %0, %1 : vector<128x1024xf32>
    %c0_1 = arith.constant 0 : index
    %c0_2 = arith.constant 0 : index
    %3 = vector.load %arg2[%c0_1, %c0_2] : memref<128x1024xf32, #tpu.memory_space<vmem>>, vector<128x1024xf32>
    tpu.vector_store %arg2[%c0_1, %c0_2], %2 {strides = array<i32>} : memref<128x1024xf32, #tpu.memory_space<vmem>>, vector<128x1024xf32>,
    return
  }
  func.func @transform_0(%arg0: i32) -> (i32, i32) {
    %c0_i32 = arith.constant 0 : i32
    %c0_i32_0 = arith.constant 0 : i32
    return %arg0, %c0_i32 : i32, i32
  }
  func.func @transform_1(%arg0: i32) -> (i32, i32) {
    %c0_i32 = arith.constant 0 : i32
    %c0_i32_0 = arith.constant 0 : i32
    return %arg0, %c0_i32 : i32, i32
  }
}

</mosaic_0001>

<llo_original>
// kernel: tpu_custom_call.1
$region0: #{tpu_custom_call.1}
  #allocation0 [shape = 'u32[]', space=smem, size = 0x4, offset = 0x4, fixed_abs, tag = 'smem constant byte address 0x4 - core index']
  #allocation1 [shape = 'u32[144,128]{1,0:T(1,128)}', space=vmem, size = 0x12000, scoped, tag = 'internal scratch']
  %s0 = inlined_call_operand.hbm [shape: f32[512,1024], index: 0, kind: input, shape index: {}]
  %s1 = inlined_call_operand.hbm [shape: f32[512,1024], index: 1, kind: output, shape index: {}]
  %s2 = sld [smem:[#allocation0]]
  $region41: #{tpu_custom_call.1} parent=0
    _
  %s4 = ssub.s32 1, %s2
  %s5 = scalar_select 0, %s4, %s2
  $region1: #{tpu_custom_call.1} parent=0
    #allocation2 [shape = 'u8[1048576]{0}', space=vmem, size = 0x100000, scoped, tag = 'input window, operand 0']
    #allocation3 [shape = 's32[2]{0}', space=sflag, size = 0x8, scoped, tag = 'scoped memory for tpu_custom_call.1']
    #allocation4 [shape = 's32[2]{0}', space=sflag, size = 0x8, scoped, tag = 'scoped memory for tpu_custom_call.1']
    #allocation5 [shape = 'u8[1048576]{0}', space=vmem, size = 0x100000, scoped, tag = 'output window, operand 0']
    %6 = vsyncpa [#allocation3], 0
    %s7 = scalar_lea.sflag [#allocation3], 1
    %8 = vsyncpa %s7, 0
    %9 = vsyncpa [#allocation4], 0
    %s10 = scalar_lea.sflag [#allocation4], 1
    %11 = vsyncpa %s10, 0
    loop: start=0, step=1, limit=6
    $region2: #{tpu_custom_call.1} parent=1 // loop_pre_header
      _
    $region3: #{tpu_custom_call.1} parent=1 // loop_header
      %s13 = sphi 0, %s17
      %p14 = scmp.ge.s32.totalorder %s13, 6
      %s23 = sphi 0, %s25
      %s26 = sphi 0, %s23
      %s27 = sphi 0, %s26
      %s43 = sphi 0, %s27
      %s49 = sphi 0, %s51
      %s52 = sphi 0, %s49
      %s53 = sphi 0, %s52
      %s69 = sphi 0, %s53
    $region4: #{tpu_custom_call.1} parent=1 // loop_header_branch
      %16 = sbr.rel (%p14) target = $region8
    $region5: #{tpu_custom_call.1} parent=1 // loop_body
      %s18 = ssub.s32 %s13, 1
      %s19 = ssub.s32 %s13, 2
      %s20 = sadd.s32 %s13, 1
      %s21 = ssub.s32 %s13, %s20
      %p22 = scmp.eq.s32.totalorder %s21, 0
      %s24 = sadd.s32 %s23, 1
      %s25 = scalar_select %p22, %s23, %s24
      %p28 = pneg %p22
      %p29 = scmp.eq.s32.totalorder %s13, 3
      %p30 = por %p28, %p29
      %p31 = scmp.ne.s32.totalorder %s23, %s26
      %p32 = scmp.eq.s32.totalorder %s13, 0
      %p33 = por %p31, %p32
      %p34 = scmp.ne.s32.totalorder %s23, %s26
      %p35 = scmp.eq.s32.totalorder %s18, 3
      %p36 = por %p34, %p35
      %p37 = scmp.ne.s32.totalorder %s26, %s27
      %p38 = scmp.eq.s32.totalorder %s18, 0
      %p39 = por %p37, %p38
      %p40 = scmp.ne.s32.totalorder %s26, %s27
      %p41 = scmp.eq.s32.totalorder %s19, 3
      %p42 = por %p40, %p41
      %p44 = scmp.ne.s32.totalorder %s27, %s43
      %p45 = scmp.eq.s32.totalorder %s19, 0
      %p46 = por %p44, %p45
      %s47 = ssub.s32 %s13, %s20
      %p48 = scmp.eq.s32.totalorder %s47, 0
      %s50 = sadd.s32 %s49, 1
      %s51 = scalar_select %p48, %s49, %s50
      %p54 = pneg %p48
      %p55 = scmp.eq.s32.totalorder %s13, 3
      %p56 = por %p54, %p55
      %p57 = scmp.ne.s32.totalorder %s49, %s52
      %p58 = scmp.eq.s32.totalorder %s13, 0
      %p59 = por %p57, %p58
      %p60 = scmp.ne.s32.totalorder %s49, %s52
      %p61 = scmp.eq.s32.totalorder %s18, 3
      %p62 = por %p60, %p61
      %p63 = scmp.ne.s32.totalorder %s52, %s53
      %p64 = scmp.eq.s32.totalorder %s18, 0
      %p65 = por %p63, %p64
      %p66 = scmp.ne.s32.totalorder %s52, %s53
      %p67 = scmp.eq.s32.totalorder %s19, 3
      %p68 = por %p66, %p67
      %p70 = scmp.ne.s32.totalorder %s53, %s69
      %p71 = scmp.eq.s32.totalorder %s19, 0
      %p72 = por %p70, %p71
      %p73 = scmp.le.s32.totalorder 1, %s13
      %p74 = scmp.lt.s32.totalorder %s13, 5
      %p75 = pnand %p73, %p74
      %p76 = pneg %p75
      // Predicated region
      $region9: #{tpu_custom_call.1} parent=5 // pred_check
        _
      $region10: #{tpu_custom_call.1} parent=5 // pred_check_branch
        %78 = sbr.rel (%p75) target = $region12
      $region11: #{tpu_custom_call.1} parent=5 // pred_region
        %s79 = ssub.s32 %s13, 1
      $region12: #{tpu_custom_call.1} parent=5 // pred_fallthru
        _
      %p80 = scmp.lt.s32.totalorder %s13, 4
      // Predicated region
      $region13: #{tpu_custom_call.1} parent=5 // pred_check
        %p81 = pneg %p80
      $region14: #{tpu_custom_call.1} parent=5 // pred_check_branch
        %83 = sbr.rel (%p81) target = $region16
      $region15: #{tpu_custom_call.1} parent=5 // pred_region
        // Predicated region
        $region17: #{tpu_custom_call.1} parent=15 // pred_check
          %p84 = pneg %p33
        $region18: #{tpu_custom_call.1} parent=15 // pred_check_branch
          %86 = sbr.rel (%p84) target = $region20
        $region19: #{tpu_custom_call.1} parent=15 // pred_region
          %s87 = sand.u32 %s23, 1
          %s88 = scalar_lea.sflag [#allocation3], %s87
          %s89 = sand.u32 %s23, 1
          %s90 = smul.addr %s89, 1024
          %s91 = scalar_lea.vmem [#allocation2], %s90
          %s92 = smul.u32 16, %s13
          %s94 = ssub.s32 16384, 16384
          %95 = vsyncadd %s88, %s94
          %s96 = smul.addr %s92, 8
          %s97 = smul.addr %s96, 128
          %s98 = scalar_lea.hbm %s0, %s97
          %s99 = sshll.u32 %s91, 4
          %s100 = int_to_ptr.vmem [resolvable:$true] %s99
          %105 = dma.hbm_to_vmem [thread:$0]  %s98, 16384, %s100, %s88, 1024, 1024, 64
        $region20: #{tpu_custom_call.1} parent=15 // pred_fallthru
          _
      $region16: #{tpu_custom_call.1} parent=5 // pred_fallthru
        _
      %p106 = scmp.le.s32.totalorder 1, %s13
      %p107 = scmp.lt.s32.totalorder %s13, 5
      %p108 = pnand %p106, %p107
      %p109 = pneg %p108
      // Predicated region
      $region21: #{tpu_custom_call.1} parent=5 // pred_check
        _
      $region22: #{tpu_custom_call.1} parent=5 // pred_check_branch
        %111 = sbr.rel (%p108) target = $region24
      $region23: #{tpu_custom_call.1} parent=5 // pred_region
        %s112 = ssub.s32 %s13, 1
        %s113 = sand.u32 %s26, 1
        %s114 = scalar_lea.sflag [#allocation3], %s113
        %s115 = sand.u32 %s26, 1
        %s116 = smul.addr %s115, 1024
        %s117 = scalar_lea.vmem [#allocation2], %s116
        // Predicated region
        $region25: #{tpu_custom_call.1} parent=23 // pred_check
          %p118 = pneg %p39
        $region26: #{tpu_custom_call.1} parent=23 // pred_check_branch
          %120 = sbr.rel (%p118) target = $region28
        $region27: #{tpu_custom_call.1} parent=23 // pred_region
          %121 = dma.done %s114, 16384
        $region28: #{tpu_custom_call.1} parent=23 // pred_fallthru
          _
        %s122 = sand.u32 %s26, 1
        %s123 = scalar_lea.sflag [#allocation3], %s122
        %s124 = sand.u32 %s26, 1
        %s125 = smul.addr %s124, 1024
        %s126 = scalar_lea.vmem [#allocation2], %s125
        %p127 = pneg %p39
        %p128 = pneg %p36
        %p129 = pneg %p65
        %p130 = pneg %p62
        %s131 = sand.u32 %s52, 1
        %s132 = scalar_lea.sflag [#allocation4], %s131
        %s133 = sand.u32 %s52, 1
        %s134 = smul.addr %s133, 1024
        %s135 = scalar_lea.vmem [#allocation5], %s134
        %s136 = smul.u32 16, %s18
        %s137 = smul.u32 16, %s18
        %v138 = vld [vmem:[%s117] sm:$0xff]
        %v139 = vld [vmem:[%s117 + $0x8] sm:$0xff]
        %v140 = vld [vmem:[%s117 + $0x10] sm:$0xff]
        %v141 = vld [vmem:[%s117 + $0x18] sm:$0xff]
        %v142 = vld [vmem:[%s117 + $0x20] sm:$0xff]
        %v143 = vld [vmem:[%s117 + $0x28] sm:$0xff]
        %v144 = vld [vmem:[%s117 + $0x30] sm:$0xff]
        %v145 = vld [vmem:[%s117 + $0x38] sm:$0xff]
        %v146 = vld [vmem:[%s117 + $0x40] sm:$0xff]
        %v147 = vld [vmem:[%s117 + $0x48] sm:$0xff]
        %v148 = vld [vmem:[%s117 + $0x50] sm:$0xff]
        %v149 = vld [vmem:[%s117 + $0x58] sm:$0xff]
        %v150 = vld [vmem:[%s117 + $0x60] sm:$0xff]
        %v151 = vld [vmem:[%s117 + $0x68] sm:$0xff]
        %v152 = vld [vmem:[%s117 + $0x70] sm:$0xff]
        %v153 = vld [vmem:[%s117 + $0x78] sm:$0xff]
        %v154 = vld [vmem:[%s117 + $0x80] sm:$0xff]
        %v155 = vld [vmem:[%s117 + $0x88] sm:$0xff]
        %v156 = vld [vmem:[%s117 + $0x90] sm:$0xff]
        %v157 = vld [vmem:[%s117 + $0x98] sm:$0xff]
        %v158 = vld [vmem:[%s117 + $0xa0] sm:$0xff]
        %v159 = vld [vmem:[%s117 + $0xa8] sm:$0xff]
        %v160 = vld [vmem:[%s117 + $0xb0] sm:$0xff]
        %v161 = vld [vmem:[%s117 + $0xb8] sm:$0xff]
        %v162 = vld [vmem:[%s117 + $0xc0] sm:$0xff]
        %v163 = vld [vmem:[%s117 + $0xc8] sm:$0xff]
        %v164 = vld [vmem:[%s117 + $0xd0] sm:$0xff]
        %v165 = vld [vmem:[%s117 + $0xd8] sm:$0xff]
        %v166 = vld [vmem:[%s117 + $0xe0] sm:$0xff]
        %v167 = vld [vmem:[%s117 + $0xe8] sm:$0xff]
        %v168 = vld [vmem:[%s117 + $0xf0] sm:$0xff]
        %v169 = vld [vmem:[%s117 + $0xf8] sm:$0xff]
        %v170 = vld [vmem:[%s117 + $0x100] sm:$0xff]
        %v171 = vld [vmem:[%s117 + $0x108] sm:$0xff]
        %v172 = vld [vmem:[%s117 + $0x110] sm:$0xff]
        %v173 = vld [vmem:[%s117 + $0x118] sm:$0xff]
        %v174 = vld [vmem:[%s117 + $0x120] sm:$0xff]
        %v175 = vld [vmem:[%s117 + $0x128] sm:$0xff]
        %v176 = vld [vmem:[%s117 + $0x130] sm:$0xff]
        %v177 = vld [vmem:[%s117 + $0x138] sm:$0xff]
        %v178 = vld [vmem:[%s117 + $0x140] sm:$0xff]
        %v179 = vld [vmem:[%s117 + $0x148] sm:$0xff]
        %v180 = vld [vmem:[%s117 + $0x150] sm:$0xff]
        %v181 = vld [vmem:[%s117 + $0x158] sm:$0xff]
        %v182 = vld [vmem:[%s117 + $0x160] sm:$0xff]
        %v183 = vld [vmem:[%s117 + $0x168] sm:$0xff]
        %v184 = vld [vmem:[%s117 + $0x170] sm:$0xff]
        %v185 = vld [vmem:[%s117 + $0x178] sm:$0xff]
        %v186 = vld [vmem:[%s117 + $0x180] sm:$0xff]
        %v187 = vld [vmem:[%s117 + $0x188] sm:$0xff]
        %v188 = vld [vmem:[%s117 + $0x190] sm:$0xff]
        %v189 = vld [vmem:[%s117 + $0x198] sm:$0xff]
        %v190 = vld [vmem:[%s117 + $0x1a0] sm:$0xff]
        %v191 = vld [vmem:[%s117 + $0x1a8] sm:$0xff]
        %v192 = vld [vmem:[%s117 + $0x1b0] sm:$0xff]
        %v193 = vld [vmem:[%s117 + $0x1b8] sm:$0xff]
        %v194 = vld [vmem:[%s117 + $0x1c0] sm:$0xff]
        %v195 = vld [vmem:[%s117 + $0x1c8] sm:$0xff]
        %v196 = vld [vmem:[%s117 + $0x1d0] sm:$0xff]
        %v197 = vld [vmem:[%s117 + $0x1d8] sm:$0xff]
        %v198 = vld [vmem:[%s117 + $0x1e0] sm:$0xff]
        %v199 = vld [vmem:[%s117 + $0x1e8] sm:$0xff]
        %v200 = vld [vmem:[%s117 + $0x1f0] sm:$0xff]
        %v201 = vld [vmem:[%s117 + $0x1f8] sm:$0xff]
        %v202 = vld [vmem:[%s117 + $0x200] sm:$0xff]
        %v203 = vld [vmem:[%s117 + $0x208] sm:$0xff]
        %v204 = vld [vmem:[%s117 + $0x210] sm:$0xff]
        %v205 = vld [vmem:[%s117 + $0x218] sm:$0xff]
        %v206 = vld [vmem:[%s117 + $0x220] sm:$0xff]
        %v207 = vld [vmem:[%s117 + $0x228] sm:$0xff]
        %v208 = vld [vmem:[%s117 + $0x230] sm:$0xff]
        %v209 = vld [vmem:[%s117 + $0x238] sm:$0xff]
        %v210 = vld [vmem:[%s117 + $0x240] sm:$0xff]
        %v211 = vld [vmem:[%s117 + $0x248] sm:$0xff]
        %v212 = vld [vmem:[%s117 + $0x250] sm:$0xff]
        %v213 = vld [vmem:[%s117 + $0x258] sm:$0xff]
        %v214 = vld [vmem:[%s117 + $0x260] sm:$0xff]
        %v215 = vld [vmem:[%s117 + $0x268] sm:$0xff]
        %v216 = vld [vmem:[%s117 + $0x270] sm:$0xff]
        %v217 = vld [vmem:[%s117 + $0x278] sm:$0xff]
        %v218 = vld [vmem:[%s117 + $0x280] sm:$0xff]
        %v219 = vld [vmem:[%s117 + $0x288] sm:$0xff]
        %v220 = vld [vmem:[%s117 + $0x290] sm:$0xff]
        %v221 = vld [vmem:[%s117 + $0x298] sm:$0xff]
        %v222 = vld [vmem:[%s117 + $0x2a0] sm:$0xff]
        %v223 = vld [vmem:[%s117 + $0x2a8] sm:$0xff]
        %v224 = vld [vmem:[%s117 + $0x2b0] sm:$0xff]
        %v225 = vld [vmem:[%s117 + $0x2b8] sm:$0xff]
        %v226 = vld [vmem:[%s117 + $0x2c0] sm:$0xff]
        %v227 = vld [vmem:[%s117 + $0x2c8] sm:$0xff]
        %v228 = vld [vmem:[%s117 + $0x2d0] sm:$0xff]
        %v229 = vld [vmem:[%s117 + $0x2d8] sm:$0xff]
        %v230 = vld [vmem:[%s117 + $0x2e0] sm:$0xff]
        %v231 = vld [vmem:[%s117 + $0x2e8] sm:$0xff]
        %v232 = vld [vmem:[%s117 + $0x2f0] sm:$0xff]
        %v233 = vld [vmem:[%s117 + $0x2f8] sm:$0xff]
        %v234 = vld [vmem:[%s117 + $0x300] sm:$0xff]
        %v235 = vld [vmem:[%s117 + $0x308] sm:$0xff]
        %v236 = vld [vmem:[%s117 + $0x310] sm:$0xff]
        %v237 = vld [vmem:[%s117 + $0x318] sm:$0xff]
        %v238 = vld [vmem:[%s117 + $0x320] sm:$0xff]
        %v239 = vld [vmem:[%s117 + $0x328] sm:$0xff]
        %v240 = vld [vmem:[%s117 + $0x330] sm:$0xff]
        %v241 = vld [vmem:[%s117 + $0x338] sm:$0xff]
        %v242 = vld [vmem:[%s117 + $0x340] sm:$0xff]
        %v243 = vld [vmem:[%s117 + $0x348] sm:$0xff]
        %v244 = vld [vmem:[%s117 + $0x350] sm:$0xff]
        %v245 = vld [vmem:[%s117 + $0x358] sm:$0xff]
        %v246 = vld [vmem:[%s117 + $0x360] sm:$0xff]
        %v247 = vld [vmem:[%s117 + $0x368] sm:$0xff]
        %v248 = vld [vmem:[%s117 + $0x370] sm:$0xff]
        %v249 = vld [vmem:[%s117 + $0x378] sm:$0xff]
        %v250 = vld [vmem:[%s117 + $0x380] sm:$0xff]
        %v251 = vld [vmem:[%s117 + $0x388] sm:$0xff]
        %v252 = vld [vmem:[%s117 + $0x390] sm:$0xff]
        %v253 = vld [vmem:[%s117 + $0x398] sm:$0xff]
        %v254 = vld [vmem:[%s117 + $0x3a0] sm:$0xff]
        %v255 = vld [vmem:[%s117 + $0x3a8] sm:$0xff]
        %v256 = vld [vmem:[%s117 + $0x3b0] sm:$0xff]
        %v257 = vld [vmem:[%s117 + $0x3b8] sm:$0xff]
        %v258 = vld [vmem:[%s117 + $0x3c0] sm:$0xff]
        %v259 = vld [vmem:[%s117 + $0x3c8] sm:$0xff]
        %v260 = vld [vmem:[%s117 + $0x3d0] sm:$0xff]
        %v261 = vld [vmem:[%s117 + $0x3d8] sm:$0xff]
        %v262 = vld [vmem:[%s117 + $0x3e0] sm:$0xff]
        %v263 = vld [vmem:[%s117 + $0x3e8] sm:$0xff]
        %v264 = vld [vmem:[%s117 + $0x3f0] sm:$0xff]
        %v265 = vld [vmem:[%s117 + $0x3f8] sm:$0xff]
        %v266 = vrcp.pop 32767.0
        %v267 = vmul.f32 %v138, %v266
        %v268 = vmul.f32 %v139, %v266
        %v269 = vmul.f32 %v140, %v266
        %v270 = vmul.f32 %v141, %v266
        %v271 = vmul.f32 %v142, %v266
        %v272 = vmul.f32 %v143, %v266
        %v273 = vmul.f32 %v144, %v266
        %v274 = vmul.f32 %v145, %v266
        %v275 = vmul.f32 %v146, %v266
        %v276 = vmul.f32 %v147, %v266
        %v277 = vmul.f32 %v148, %v266
        %v278 = vmul.f32 %v149, %v266
        %v279 = vmul.f32 %v150, %v266
        %v280 = vmul.f32 %v151, %v266
        %v281 = vmul.f32 %v152, %v266
        %v282 = vmul.f32 %v153, %v266
        %v283 = vmul.f32 %v154, %v266
        %v284 = vmul.f32 %v155, %v266
        %v285 = vmul.f32 %v156, %v266
        %v286 = vmul.f32 %v157, %v266
        %v287 = vmul.f32 %v158, %v266
        %v288 = vmul.f32 %v159, %v266
        %v289 = vmul.f32 %v160, %v266
        %v290 = vmul.f32 %v161, %v266
        %v291 = vmul.f32 %v162, %v266
        %v292 = vmul.f32 %v163, %v266
        %v293 = vmul.f32 %v164, %v266
        %v294 = vmul.f32 %v165, %v266
        %v295 = vmul.f32 %v166, %v266
        %v296 = vmul.f32 %v167, %v266
        %v297 = vmul.f32 %v168, %v266
        %v298 = vmul.f32 %v169, %v266
        %v299 = vmul.f32 %v170, %v266
        %v300 = vmul.f32 %v171, %v266
        %v301 = vmul.f32 %v172, %v266
        %v302 = vmul.f32 %v173, %v266
        %v303 = vmul.f32 %v174, %v266
        %v304 = vmul.f32 %v175, %v266
        %v305 = vmul.f32 %v176, %v266
        %v306 = vmul.f32 %v177, %v266
        %v307 = vmul.f32 %v178, %v266
        %v308 = vmul.f32 %v179, %v266
        %v309 = vmul.f32 %v180, %v266
        %v310 = vmul.f32 %v181, %v266
        %v311 = vmul.f32 %v182, %v266
        %v312 = vmul.f32 %v183, %v266
        %v313 = vmul.f32 %v184, %v266
        %v314 = vmul.f32 %v185, %v266
        %v315 = vmul.f32 %v186, %v266
        %v316 = vmul.f32 %v187, %v266
        %v317 = vmul.f32 %v188, %v266
        %v318 = vmul.f32 %v189, %v266
        %v319 = vmul.f32 %v190, %v266
        %v320 = vmul.f32 %v191, %v266
        %v321 = vmul.f32 %v192, %v266
        %v322 = vmul.f32 %v193, %v266
        %v323 = vmul.f32 %v194, %v266
        %v324 = vmul.f32 %v195, %v266
        %v325 = vmul.f32 %v196, %v266
        %v326 = vmul.f32 %v197, %v266
        %v327 = vmul.f32 %v198, %v266
        %v328 = vmul.f32 %v199, %v266
        %v329 = vmul.f32 %v200, %v266
        %v330 = vmul.f32 %v201, %v266
        %v331 = vmul.f32 %v202, %v266
        %v332 = vmul.f32 %v203, %v266
        %v333 = vmul.f32 %v204, %v266
        %v334 = vmul.f32 %v205, %v266
        %v335 = vmul.f32 %v206, %v266
        %v336 = vmul.f32 %v207, %v266
        %v337 = vmul.f32 %v208, %v266
        %v338 = vmul.f32 %v209, %v266
        %v339 = vmul.f32 %v210, %v266
        %v340 = vmul.f32 %v211, %v266
        %v341 = vmul.f32 %v212, %v266
        %v342 = vmul.f32 %v213, %v266
        %v343 = vmul.f32 %v214, %v266
        %v344 = vmul.f32 %v215, %v266
        %v345 = vmul.f32 %v216, %v266
        %v346 = vmul.f32 %v217, %v266
        %v347 = vmul.f32 %v218, %v266
        %v348 = vmul.f32 %v219, %v266
        %v349 = vmul.f32 %v220, %v266
        %v350 = vmul.f32 %v221, %v266
        %v351 = vmul.f32 %v222, %v266
        %v352 = vmul.f32 %v223, %v266
        %v353 = vmul.f32 %v224, %v266
        %v354 = vmul.f32 %v225, %v266
        %v355 = vmul.f32 %v226, %v266
        %v356 = vmul.f32 %v227, %v266
        %v357 = vmul.f32 %v228, %v266
        %v358 = vmul.f32 %v229, %v266
        %v359 = vmul.f32 %v230, %v266
        %v360 = vmul.f32 %v231, %v266
        %v361 = vmul.f32 %v232, %v266
        %v362 = vmul.f32 %v233, %v266
        %v363 = vmul.f32 %v234, %v266
        %v364 = vmul.f32 %v235, %v266
        %v365 = vmul.f32 %v236, %v266
        %v366 = vmul.f32 %v237, %v266
        %v367 = vmul.f32 %v238, %v266
        %v368 = vmul.f32 %v239, %v266
        %v369 = vmul.f32 %v240, %v266
        %v370 = vmul.f32 %v241, %v266
        %v371 = vmul.f32 %v242, %v266
        %v372 = vmul.f32 %v243, %v266
        %v373 = vmul.f32 %v244, %v266
        %v374 = vmul.f32 %v245, %v266
        %v375 = vmul.f32 %v246, %v266
        %v376 = vmul.f32 %v247, %v266
        %v377 = vmul.f32 %v248, %v266
        %v378 = vmul.f32 %v249, %v266
        %v379 = vmul.f32 %v250, %v266
        %v380 = vmul.f32 %v251, %v266
        %v381 = vmul.f32 %v252, %v266
        %v382 = vmul.f32 %v253, %v266
        %v383 = vmul.f32 %v254, %v266
        %v384 = vmul.f32 %v255, %v266
        %v385 = vmul.f32 %v256, %v266
        %v386 = vmul.f32 %v257, %v266
        %v387 = vmul.f32 %v258, %v266
        %v388 = vmul.f32 %v259, %v266
        %v389 = vmul.f32 %v260, %v266
        %v390 = vmul.f32 %v261, %v266
        %v391 = vmul.f32 %v262, %v266
        %v392 = vmul.f32 %v263, %v266
        %v393 = vmul.f32 %v264, %v266
        %v394 = vmul.f32 %v265, %v266
        %395 = vst [vmem:[%s135] sm:$0xff] %v267
        %396 = vst [vmem:[%s135 + $0x8] sm:$0xff] %v268
        %397 = vst [vmem:[%s135 + $0x10] sm:$0xff] %v269
        %398 = vst [vmem:[%s135 + $0x18] sm:$0xff] %v270
        %399 = vst [vmem:[%s135 + $0x20] sm:$0xff] %v271
        %400 = vst [vmem:[%s135 + $0x28] sm:$0xff] %v272
        %401 = vst [vmem:[%s135 + $0x30] sm:$0xff] %v273
        %402 = vst [vmem:[%s135 + $0x38] sm:$0xff] %v274
        %403 = vst [vmem:[%s135 + $0x40] sm:$0xff] %v275
        %404 = vst [vmem:[%s135 + $0x48] sm:$0xff] %v276
        %405 = vst [vmem:[%s135 + $0x50] sm:$0xff] %v277
        %406 = vst [vmem:[%s135 + $0x58] sm:$0xff] %v278
        %407 = vst [vmem:[%s135 + $0x60] sm:$0xff] %v279
        %408 = vst [vmem:[%s135 + $0x68] sm:$0xff] %v280
        %409 = vst [vmem:[%s135 + $0x70] sm:$0xff] %v281
        %410 = vst [vmem:[%s135 + $0x78] sm:$0xff] %v282
        %411 = vst [vmem:[%s135 + $0x80] sm:$0xff] %v283
        %412 = vst [vmem:[%s135 + $0x88] sm:$0xff] %v284
        %413 = vst [vmem:[%s135 + $0x90] sm:$0xff] %v285
        %414 = vst [vmem:[%s135 + $0x98] sm:$0xff] %v286
        %415 = vst [vmem:[%s135 + $0xa0] sm:$0xff] %v287
        %416 = vst [vmem:[%s135 + $0xa8] sm:$0xff] %v288
        %417 = vst [vmem:[%s135 + $0xb0] sm:$0xff] %v289
        %418 = vst [vmem:[%s135 + $0xb8] sm:$0xff] %v290
        %419 = vst [vmem:[%s135 + $0xc0] sm:$0xff] %v291
        %420 = vst [vmem:[%s135 + $0xc8] sm:$0xff] %v292
        %421 = vst [vmem:[%s135 + $0xd0] sm:$0xff] %v293
        %422 = vst [vmem:[%s135 + $0xd8] sm:$0xff] %v294
        %423 = vst [vmem:[%s135 + $0xe0] sm:$0xff] %v295
        %424 = vst [vmem:[%s135 + $0xe8] sm:$0xff] %v296
        %425 = vst [vmem:[%s135 + $0xf0] sm:$0xff] %v297
        %426 = vst [vmem:[%s135 + $0xf8] sm:$0xff] %v298
        %427 = vst [vmem:[%s135 + $0x100] sm:$0xff] %v299
        %428 = vst [vmem:[%s135 + $0x108] sm:$0xff] %v300
        %429 = vst [vmem:[%s135 + $0x110] sm:$0xff] %v301
        %430 = vst [vmem:[%s135 + $0x118] sm:$0xff] %v302
        %431 = vst [vmem:[%s135 + $0x120] sm:$0xff] %v303
        %432 = vst [vmem:[%s135 + $0x128] sm:$0xff] %v304
        %433 = vst [vmem:[%s135 + $0x130] sm:$0xff] %v305
        %434 = vst [vmem:[%s135 + $0x138] sm:$0xff] %v306
        %435 = vst [vmem:[%s135 + $0x140] sm:$0xff] %v307
        %436 = vst [vmem:[%s135 + $0x148] sm:$0xff] %v308
        %437 = vst [vmem:[%s135 + $0x150] sm:$0xff] %v309
        %438 = vst [vmem:[%s135 + $0x158] sm:$0xff] %v310
        %439 = vst [vmem:[%s135 + $0x160] sm:$0xff] %v311
        %440 = vst [vmem:[%s135 + $0x168] sm:$0xff] %v312
        %441 = vst [vmem:[%s135 + $0x170] sm:$0xff] %v313
        %442 = vst [vmem:[%s135 + $0x178] sm:$0xff] %v314
        %443 = vst [vmem:[%s135 + $0x180] sm:$0xff] %v315
        %444 = vst [vmem:[%s135 + $0x188] sm:$0xff] %v316
        %445 = vst [vmem:[%s135 + $0x190] sm:$0xff] %v317
        %446 = vst [vmem:[%s135 + $0x198] sm:$0xff] %v318
        %447 = vst [vmem:[%s135 + $0x1a0] sm:$0xff] %v319
        %448 = vst [vmem:[%s135 + $0x1a8] sm:$0xff] %v320
        %449 = vst [vmem:[%s135 + $0x1b0] sm:$0xff] %v321
        %450 = vst [vmem:[%s135 + $0x1b8] sm:$0xff] %v322
        %451 = vst [vmem:[%s135 + $0x1c0] sm:$0xff] %v323
        %452 = vst [vmem:[%s135 + $0x1c8] sm:$0xff] %v324
        %453 = vst [vmem:[%s135 + $0x1d0] sm:$0xff] %v325
        %454 = vst [vmem:[%s135 + $0x1d8] sm:$0xff] %v326
        %455 = vst [vmem:[%s135 + $0x1e0] sm:$0xff] %v327
        %456 = vst [vmem:[%s135 + $0x1e8] sm:$0xff] %v328
        %457 = vst [vmem:[%s135 + $0x1f0] sm:$0xff] %v329
        %458 = vst [vmem:[%s135 + $0x1f8] sm:$0xff] %v330
        %459 = vst [vmem:[%s135 + $0x200] sm:$0xff] %v331
        %460 = vst [vmem:[%s135 + $0x208] sm:$0xff] %v332
        %461 = vst [vmem:[%s135 + $0x210] sm:$0xff] %v333
        %462 = vst [vmem:[%s135 + $0x218] sm:$0xff] %v334
        %463 = vst [vmem:[%s135 + $0x220] sm:$0xff] %v335
        %464 = vst [vmem:[%s135 + $0x228] sm:$0xff] %v336
        %465 = vst [vmem:[%s135 + $0x230] sm:$0xff] %v337
        %466 = vst [vmem:[%s135 + $0x238] sm:$0xff] %v338
        %467 = vst [vmem:[%s135 + $0x240] sm:$0xff] %v339
        %468 = vst [vmem:[%s135 + $0x248] sm:$0xff] %v340
        %469 = vst [vmem:[%s135 + $0x250] sm:$0xff] %v341
        %470 = vst [vmem:[%s135 + $0x258] sm:$0xff] %v342
        %471 = vst [vmem:[%s135 + $0x260] sm:$0xff] %v343
        %472 = vst [vmem:[%s135 + $0x268] sm:$0xff] %v344
        %473 = vst [vmem:[%s135 + $0x270] sm:$0xff] %v345
        %474 = vst [vmem:[%s135 + $0x278] sm:$0xff] %v346
        %475 = vst [vmem:[%s135 + $0x280] sm:$0xff] %v347
        %476 = vst [vmem:[%s135 + $0x288] sm:$0xff] %v348
        %477 = vst [vmem:[%s135 + $0x290] sm:$0xff] %v349
        %478 = vst [vmem:[%s135 + $0x298] sm:$0xff] %v350
        %479 = vst [vmem:[%s135 + $0x2a0] sm:$0xff] %v351
        %480 = vst [vmem:[%s135 + $0x2a8] sm:$0xff] %v352
        %481 = vst [vmem:[%s135 + $0x2b0] sm:$0xff] %v353
        %482 = vst [vmem:[%s135 + $0x2b8] sm:$0xff] %v354
        %483 = vst [vmem:[%s135 + $0x2c0] sm:$0xff] %v355
        %484 = vst [vmem:[%s135 + $0x2c8] sm:$0xff] %v356
        %485 = vst [vmem:[%s135 + $0x2d0] sm:$0xff] %v357
        %486 = vst [vmem:[%s135 + $0x2d8] sm:$0xff] %v358
        %487 = vst [vmem:[%s135 + $0x2e0] sm:$0xff] %v359
        %488 = vst [vmem:[%s135 + $0x2e8] sm:$0xff] %v360
        %489 = vst [vmem:[%s135 + $0x2f0] sm:$0xff] %v361
        %490 = vst [vmem:[%s135 + $0x2f8] sm:$0xff] %v362
        %491 = vst [vmem:[%s135 + $0x300] sm:$0xff] %v363
        %492 = vst [vmem:[%s135 + $0x308] sm:$0xff] %v364
        %493 = vst [vmem:[%s135 + $0x310] sm:$0xff] %v365
        %494 = vst [vmem:[%s135 + $0x318] sm:$0xff] %v366
        %495 = vst [vmem:[%s135 + $0x320] sm:$0xff] %v367
        %496 = vst [vmem:[%s135 + $0x328] sm:$0xff] %v368
        %497 = vst [vmem:[%s135 + $0x330] sm:$0xff] %v369
        %498 = vst [vmem:[%s135 + $0x338] sm:$0xff] %v370
        %499 = vst [vmem:[%s135 + $0x340] sm:$0xff] %v371
        %500 = vst [vmem:[%s135 + $0x348] sm:$0xff] %v372
        %501 = vst [vmem:[%s135 + $0x350] sm:$0xff] %v373
        %502 = vst [vmem:[%s135 + $0x358] sm:$0xff] %v374
        %503 = vst [vmem:[%s135 + $0x360] sm:$0xff] %v375
        %504 = vst [vmem:[%s135 + $0x368] sm:$0xff] %v376
        %505 = vst [vmem:[%s135 + $0x370] sm:$0xff] %v377
        %506 = vst [vmem:[%s135 + $0x378] sm:$0xff] %v378
        %507 = vst [vmem:[%s135 + $0x380] sm:$0xff] %v379
        %508 = vst [vmem:[%s135 + $0x388] sm:$0xff] %v380
        %509 = vst [vmem:[%s135 + $0x390] sm:$0xff] %v381
        %510 = vst [vmem:[%s135 + $0x398] sm:$0xff] %v382
        %511 = vst [vmem:[%s135 + $0x3a0] sm:$0xff] %v383
        %512 = vst [vmem:[%s135 + $0x3a8] sm:$0xff] %v384
        %513 = vst [vmem:[%s135 + $0x3b0] sm:$0xff] %v385
        %514 = vst [vmem:[%s135 + $0x3b8] sm:$0xff] %v386
        %515 = vst [vmem:[%s135 + $0x3c0] sm:$0xff] %v387
        %516 = vst [vmem:[%s135 + $0x3c8] sm:$0xff] %v388
        %517 = vst [vmem:[%s135 + $0x3d0] sm:$0xff] %v389
        %518 = vst [vmem:[%s135 + $0x3d8] sm:$0xff] %v390
        %519 = vst [vmem:[%s135 + $0x3e0] sm:$0xff] %v391
        %520 = vst [vmem:[%s135 + $0x3e8] sm:$0xff] %v392
        %521 = vst [vmem:[%s135 + $0x3f0] sm:$0xff] %v393
        %522 = vst [vmem:[%s135 + $0x3f8] sm:$0xff] %v394
        %s523 = sand.u32 %s52, 1
        %s524 = scalar_lea.sflag [#allocation4], %s523
        %s525 = sand.u32 %s52, 1
        %s526 = smul.addr %s525, 1024
        %s527 = scalar_lea.vmem [#allocation5], %s526
        // Predicated region
        $region29: #{tpu_custom_call.1} parent=23 // pred_check
          %p528 = pneg %p62
        $region30: #{tpu_custom_call.1} parent=23 // pred_check_branch
          %530 = sbr.rel (%p528) target = $region32
        $region31: #{tpu_custom_call.1} parent=23 // pred_region
          %s531 = smul.u32 16, %s18
          %s533 = ssub.s32 16384, 16384
          %534 = vsyncadd %s524, %s533
          %s535 = smul.addr %s531, 8
          %s536 = smul.addr %s535, 128
          %s537 = scalar_lea.hbm %s1, %s536
          %s538 = sshll.u32 %s527, 4
          %s539 = int_to_ptr.vmem [resolvable:$true] %s538
          %544 = dma.vmem_to_hbm [thread:$0]  %s539, 16384, %s537, %s524, 1024, 1024, 64
        $region32: #{tpu_custom_call.1} parent=23 // pred_fallthru
          _
      $region24: #{tpu_custom_call.1} parent=5 // pred_fallthru
        _
      %p545 = scmp.le.s32.totalorder 2, %s13
      // Predicated region
      $region33: #{tpu_custom_call.1} parent=5 // pred_check
        %p546 = pneg %p545
      $region34: #{tpu_custom_call.1} parent=5 // pred_check_branch
        %548 = sbr.rel (%p546) target = $region36
      $region35: #{tpu_custom_call.1} parent=5 // pred_region
        %s549 = ssub.s32 %s13, 2
        // Predicated region
        $region37: #{tpu_custom_call.1} parent=35 // pred_check
          %p550 = pneg %p68
        $region38: #{tpu_custom_call.1} parent=35 // pred_check_branch
          %552 = sbr.rel (%p550) target = $region40
        $region39: #{tpu_custom_call.1} parent=35 // pred_region
          %s553 = sand.u32 %s53, 1
          %s554 = scalar_lea.sflag [#allocation4], %s553
          %s555 = sand.u32 %s53, 1
          %s556 = smul.addr %s555, 1024
          %s557 = scalar_lea.vmem [#allocation5], %s556
          %558 = dma.done %s554, 16384
        $region40: #{tpu_custom_call.1} parent=35 // pred_fallthru
          _
      $region36: #{tpu_custom_call.1} parent=5 // pred_fallthru
        _
    $region6: #{tpu_custom_call.1} parent=1 // loop_footer
      %s17 = sadd.s32 1, %s13
    $region7: #{tpu_custom_call.1} parent=1 // loop_footer_branch
      %12 = sbr.rel target = $region3
    $region8: #{tpu_custom_call.1} parent=1 // loop_exit
      _
    %559 = vsyncpa [#allocation3], 1
    %s560 = scalar_lea.sflag [#allocation3], 1
    %561 = vsyncpa %s560, 1
    %562 = vsyncpa [#allocation4], 1
    %s563 = scalar_lea.sflag [#allocation4], 1
    %564 = vsyncpa %s563, 1

</llo_original>
